<compile_context>
chip_gen: v7x
topology: tpu7x:2x2x1
jax: 0.10.0
libtpu: 0.0.40
codegen_flags: <defaults>
</compile_context>

<pallas_src>
import jax
import jax.numpy as jnp
from jax.experimental import pallas as pl
from jax.experimental.pallas import tpu as pltpu


def _dense_nn_kernel(x_ref, w0_ref, b0_ref, w1_ref, b1_ref, w2_ref, b2_ref, o_ref):
    # Layer 0: Linear(num_features -> num_units) + ReLU, f32 accumulation on the MXU.
    h = jnp.dot(x_ref[...], w0_ref[...], preferred_element_type=jnp.float32)
    h = jnp.maximum(h + b0_ref[...], 0.0)
    # Layer 1: Linear(num_units -> 10) + ReLU.
    h = jnp.dot(h.astype(w1_ref.dtype), w1_ref[...], preferred_element_type=jnp.float32)
    h = jnp.maximum(h + b1_ref[...], 0.0)
    # Output layer: Linear(10 -> 1), computed as (1,10) . (tb,10)^T -> (1, tb)
    # so the batch lands on the 128-lane axis: lane-dense, unmasked stores and a
    # contiguous writeback DMA (the biggest measured Pallas output-layout lever).
    o = jax.lax.dot_general(
        w2_ref[...], h.astype(w2_ref.dtype),
        dimension_numbers=(((1,), (1,)), ((), ())),
        preferred_element_type=jnp.float32,
    )
    o_ref[...] = (o + b2_ref[...]).astype(o_ref.dtype)


def _round_up(x, m):
    return (x + m - 1) // m * m


def _padded_bytes_2d(shape, dtype):
    """VMEM footprint of a 2-D block after (sublane, 128)-lane tiling/padding."""
    r, c = shape
    itemsize = jnp.dtype(dtype).itemsize
    sublane = max(8, 32 // max(itemsize, 1))   # 8 for f32, 16 for bf16, 32 for int8
    return _round_up(r, sublane) * _round_up(c, 128) * itemsize


_DEFAULT_VMEM_CAPACITY = 64 * 1024 * 1024      # v7x per-TensorCore VMEM (most restrictive)
_MAX_BLOCK_BATCH = 32768                       # per-step overhead already <~10-20% here


def _vmem_limit_bytes():
    """Generation-aware scoped-VMEM budget: ~75% of physical capacity."""
    cap = _DEFAULT_VMEM_CAPACITY
    try:
        info = pltpu.get_tpu_info()
        cap = int(getattr(info, "vmem_capacity_bytes", cap) or cap)
    except Exception:
        pass
    # ~96 MiB on v5e/v6e (128 MiB physical), ~48 MiB on v7x (64 MiB physical).
    return max(32 * 1024 * 1024, (cap * 3) // 4)


def _choose_block_batch(batch, features, x_dtype, resident_bytes, vmem_limit):
    """Largest batch tile that fits the per-generation VMEM budget (lane-padded)."""
    itemsize = jnp.dtype(x_dtype).itemsize
    row_x = _round_up(max(features, 1), 128) * itemsize   # lane-padded X bytes per row
    row_tmp = 5 * 128 * 4                                 # f32 intermediates (h0/h1, relu, casts)
    per_row = 2 * row_x + row_tmp                         # X stream is double-buffered
    budget = vmem_limit - resident_bytes - 4 * 1024 * 1024
    tb_max = budget // per_row
    if tb_max < 128:
        # TODO(synk): add a feature (K) grid axis + f32 accumulator for very large
        # num_features instead of requiring w0 and a full X tile to be VMEM-resident.
        raise ValueError(
            f"num_features={features} too large for a single VMEM-resident tile; "
            "feature (K) tiling is not implemented.")
    tb_max = min(int(tb_max), _MAX_BLOCK_BATCH)
    # >= 2 tiles lets v7x's two TensorCores split the batch (no effect on v5e/v6e).
    n_min = 2 if batch >= 4096 else 1
    n_tiles = max(int(pl.cdiv(batch, tb_max)), n_min)
    if n_tiles == 1:
        return _round_up(batch, 8)                        # single tile == full array dims
    return _round_up(int(pl.cdiv(batch, n_tiles)), 128)   # lane-aligned output blocks


def dense_nn_forward(x, params, *, block_batch=None):
    """x: [B, num_features]; params: dict of (w0,b0,w1,b1,w2,b2) with weights [in,out].

    Returns [B, 1] in x.dtype. Accumulation is always float32 in-kernel.
    Recommended production path: bf16 x + cast_params(params, jnp.bfloat16).
    """
    w0, b0, w1, b1, w2, b2 = (params[k] for k in ("w0", "b0", "w1", "b1", "w2", "b2"))
    B, F = x.shape
    # (10, 1) -> (1, 10): final layer is w2_row . h1^T so output is lane-dense (1, tb).
    w2_row = jnp.reshape(w2, (1, w2.shape[0]))

    vmem_limit = _vmem_limit_bytes()
    resident_bytes = 2 * sum(
        _padded_bytes_2d(a.shape, a.dtype) for a in (w0, b0, w1, b1, w2_row, b2))

    if block_batch is None:
        tb = _choose_block_batch(B, F, x.dtype, resident_bytes, vmem_limit)
    else:
        tb = max(8, _round_up(int(block_batch), 8))
    tb = min(tb, _round_up(B, 8))
    if _round_up(B, tb) != tb:          # multi-tile: keep output blocks multiple-of-128 lanes
        tb = _round_up(tb, 128)
    b_pad = _round_up(B, tb)
    if b_pad != B:
        # Zero-pad the ragged last tile; padded rows are sliced off below.
        x = jnp.pad(x, ((0, b_pad - B), (0, 0)))
    n_tiles = b_pad // tb

    def resident(arr):
        # Constant block index -> stays VMEM-resident, never re-DMA'd across grid steps.
        return pl.BlockSpec(arr.shape, lambda i: (0, 0))

    out = pl.pallas_call(
        _dense_nn_kernel,
        out_shape=jax.ShapeDtypeStruct((1, b_pad), x.dtype),
        grid_spec=pltpu.PrefetchScalarGridSpec(
            num_scalar_prefetch=0,
            grid=(n_tiles,),
            in_specs=[
                pl.BlockSpec((tb, F), lambda i: (i, 0)),       # X: streamed per batch tile
                resident(w0), resident(b0),
                resident(w1), resident(b1),
                resident(w2_row), resident(b2),
            ],
            out_specs=pl.BlockSpec((1, tb), lambda i: (0, i)),  # lane-dense output row block
        ),
        compiler_params=pltpu.CompilerParams(
            dimension_semantics=("parallel",),   # megacore sharding on v7x
            vmem_limit_bytes=int(vmem_limit),    # per-generation budget (v7x vs v5e/v6e)
        ),
    )(x, w0, b0, w1, b1, w2_row, b2)
    return out[0, :B].reshape(B, 1)


def init_params(key, num_features, num_units=10):
    """PyTorch-style Linear init U(-1/sqrt(fan_in), +1/sqrt(fan_in)).
    Weights stored as [in, out]; biases as [1, out] float32."""
    def linear(k, fan_in, fan_out):
        kw, kb = jax.random.split(k)
        bound = 1.0 / jnp.sqrt(fan_in)
        w = jax.random.uniform(kw, (fan_in, fan_out), jnp.float32, -bound, bound)
        b = jax.random.uniform(kb, (1, fan_out), jnp.float32, -bound, bound)
        return w, b

    k0, k1, k2 = jax.random.split(key, 3)
    w0, b0 = linear(k0, num_features, num_units)
    w1, b1 = linear(k1, num_units, 10)
    w2, b2 = linear(k2, 10, 1)
    return {"w0": w0, "b0": b0, "w1": w1, "b1": b1, "w2": w2, "b2": b2}


def cast_params(params, dtype):
    """Cast weights to the HBM-traffic dtype (e.g. bf16); keep f32 biases."""
    out = dict(params)
    for k in ("w0", "w1", "w2"):
        out[k] = params[k].astype(dtype)
    return out


def dense_nn_reference(x, p):
    h = jnp.maximum(x @ p["w0"] + p["b0"], 0.0)
    h = jnp.maximum(h @ p["w1"] + p["b1"], 0.0)
    return h @ p["w2"] + p["b2"]


if __name__ == "__main__":
    key = jax.random.PRNGKey(0)
    k_x, k_p, k_x2, k_x3 = jax.random.split(key, 4)

    num_features, num_units = 32, 16
    params = init_params(k_p, num_features, num_units)

    # 1) Small single-tile f32 case (auto tile sizing).
    x_small = jax.random.normal(k_x, (8, num_features), jnp.float32)
    out_small = jax.block_until_ready(dense_nn_forward(x_small, params))
    ref_small = dense_nn_reference(x_small, params)
    assert out_small.shape == (8, 1), out_small.shape
    assert jnp.allclose(out_small, ref_small, atol=1e-5, rtol=1e-5), "f32 small mismatch"

    # 2) Multi-tile case exercising the batch grid + ragged-tail padding.
    x_big = jax.random.normal(k_x2, (600, num_features), jnp.float32)
    out_big = jax.block_until_ready(dense_nn_forward(x_big, params, block_batch=256))
    ref_big = dense_nn_reference(x_big, params)
    assert out_big.shape == (600, 1), out_big.shape
    assert jnp.allclose(out_big, ref_big, atol=1e-4, rtol=1e-4), "f32 tiled mismatch"

    # 3) Auto tile sizing with a batch large enough to force >=2 tiles (v7x megacore path).
    x_auto = jax.random.normal(k_x3, (4500, num_features), jnp.float32)
    out_auto = jax.block_until_ready(dense_nn_forward(x_auto, params))
    ref_auto = dense_nn_reference(x_auto, params)
    assert out_auto.shape == (4500, 1), out_auto.shape
    assert jnp.allclose(out_auto, ref_auto, atol=1e-4, rtol=1e-4), "f32 auto mismatch"

    # 4) bf16 HBM traffic for X and weights (recommended production path),
    #    f32 accumulation in-kernel.
    x_bf16 = x_big.astype(jnp.bfloat16)
    params_bf16 = cast_params(params, jnp.bfloat16)
    out_bf16 = jax.block_until_ready(
        dense_nn_forward(x_bf16, params_bf16, block_batch=256))
    assert out_bf16.shape == (600, 1), out_bf16.shape
    assert jnp.allclose(out_bf16.astype(jnp.float32), ref_big, atol=3e-2, rtol=3e-2), \
        "bf16 tiled mismatch"

    print("KERNEL_OK")
</pallas_src>

<mosaic_0001>
module attributes {stable_mosaic.version = 11 : i64} {
  func.func @_dense_nn_kernel(%arg0: i32, %arg1: memref<8x32xf32, #tpu.memory_space<vmem>>, %arg2: memref<32x16xf32, #tpu.memory_space<vmem>>, %arg3: memref<1x16xf32, #tpu.memory_space<vmem>>, %arg4: memref<16x10xf32, #tpu.memory_space<vmem>>, %arg5: memref<1x10xf32, #tpu.memory_space<vmem>>, %arg6: memref<1x10xf32, #tpu.memory_space<vmem>>, %arg7: memref<1x1xf32, #tpu.memory_space<vmem>>, %arg8: memref<1x8xf32, #tpu.memory_space<vmem>>) attributes {dimension_semantics = [#tpu.dimension_semantics<parallel>], iteration_bounds = array<i64: 1>, scalar_prefetch = 0 : i64, scratch_operands = 0 : i64, tpu.core_type = #tpu.core_type<tc>, window_params = [{transform_indices = @transform_0, window_bounds = array<i64: 8, 32>}, {pipeline_mode = #tpu.pipeline_mode<synchronous>, transform_indices = @transform_1, window_bounds = array<i64: 32, 16>}, {pipeline_mode = #tpu.pipeline_mode<synchronous>, transform_indices = @transform_2, window_bounds = array<i64: 1, 16>}, {pipeline_mode = #tpu.pipeline_mode<synchronous>, transform_indices = @transform_3, window_bounds = array<i64: 16, 10>}, {pipeline_mode = #tpu.pipeline_mode<synchronous>, transform_indices = @transform_4, window_bounds = array<i64: 1, 10>}, {pipeline_mode = #tpu.pipeline_mode<synchronous>, transform_indices = @transform_5, window_bounds = array<i64: 1, 10>}, {pipeline_mode = #tpu.pipeline_mode<synchronous>, transform_indices = @transform_6, window_bounds = array<i64: 1, 1>}, {transform_indices = @transform_7, window_bounds = array<i64: 1, 8>}]} {
    %c0 = arith.constant 0 : index
    %c0_0 = arith.constant 0 : index
    %0 = vector.load %arg1[%c0, %c0_0] : memref<8x32xf32, #tpu.memory_space<vmem>>, vector<8x32xf32>
    %c0_1 = arith.constant 0 : index
    %c0_2 = arith.constant 0 : index
    %1 = vector.load %arg2[%c0_1, %c0_2] : memref<32x16xf32, #tpu.memory_space<vmem>>, vector<32x16xf32>
    %cst = arith.constant dense<0.000000e+00> : vector<8x16xf32>
    %2 = tpu.matmul %0, %1, %cst {dimension_numbers = #tpu.dot_dimension_numbers<[1], [0], [0], [1], [0, 0, 1, 1], [], []>} : vector<8x32xf32>, vector<32x16xf32>, vector<8x16xf32> -> vector<8x16xf32>
    %c0_3 = arith.constant 0 : index
    %c0_4 = arith.constant 0 : index
    %3 = vector.load %arg3[%c0_3, %c0_4] : memref<1x16xf32, #tpu.memory_space<vmem>>, vector<1x16xf32>
    %4 = vector.broadcast %3 : vector<1x16xf32> to vector<8x16xf32>
    %5 = arith.addf %2, %4 : vector<8x16xf32>
    %cst_5 = arith.constant 0.000000e+00 : f32
    %6 = vector.broadcast %cst_5 : f32 to vector<8x16xf32>
    %7 = arith.maximumf %5, %6 : vector<8x16xf32>
    %c0_6 = arith.constant 0 : index
    %c0_7 = arith.constant 0 : index
    %8 = vector.load %arg4[%c0_6, %c0_7] : memref<16x10xf32, #tpu.memory_space<vmem>>, vector<16x10xf32>
    %cst_8 = arith.constant dense<0.000000e+00> : vector<8x10xf32>
    %9 = tpu.matmul %7, %8, %cst_8 {dimension_numbers = #tpu.dot_dimension_numbers<[1], [0], [0], [1], [0, 0, 1, 1], [], []>} : vector<8x16xf32>, vector<16x10xf32>, vector<8x10xf32> -> vector<8x10xf32>
    %c0_9 = arith.constant 0 : index
    %c0_10 = arith.constant 0 : index
    %10 = vector.load %arg5[%c0_9, %c0_10] : memref<1x10xf32, #tpu.memory_space<vmem>>, vector<1x10xf32>
    %11 = vector.broadcast %10 : vector<1x10xf32> to vector<8x10xf32>
    %12 = arith.addf %9, %11 : vector<8x10xf32>
    %cst_11 = arith.constant 0.000000e+00 : f32
    %13 = vector.broadcast %cst_11 : f32 to vector<8x10xf32>
    %14 = arith.maximumf %12, %13 : vector<8x10xf32>
    %c0_12 = arith.constant 0 : index
    %c0_13 = arith.constant 0 : index
    %15 = vector.load %arg6[%c0_12, %c0_13] : memref<1x10xf32, #tpu.memory_space<vmem>>, vector<1x10xf32>
    %cst_14 = arith.constant dense<0.000000e+00> : vector<1x8xf32>
    %16 = tpu.matmul %15, %14, %cst_14 {dimension_numbers = #tpu.dot_dimension_numbers<[1], [1], [0], [0], [0, 0, 1, 0], [], []>} : vector<1x10xf32>, vector<8x10xf32>, vector<1x8xf32> -> vector<1x8xf32>
    %c0_15 = arith.constant 0 : index
    %c0_16 = arith.constant 0 : index
    %17 = vector.load %arg7[%c0_15, %c0_16] : memref<1x1xf32, #tpu.memory_space<vmem>>, vector<1x1xf32>
    %18 = vector.broadcast %17 : vector<1x1xf32> to vector<1x8xf32>
    %19 = arith.addf %16, %18 : vector<1x8xf32>
    %c0_17 = arith.constant 0 : index
    %c0_18 = arith.constant 0 : index
    %20 = vector.load %arg8[%c0_17, %c0_18] : memref<1x8xf32, #tpu.memory_space<vmem>>, vector<1x8xf32>
    tpu.vector_store %arg8[%c0_17, %c0_18], %19 {strides = array<i32>} : memref<1x8xf32, #tpu.memory_space<vmem>>, vector<1x8xf32>,
    return
  }
  func.func @transform_0(%arg0: i32) -> (i32, i32) {
    %c0_i32 = arith.constant 0 : i32
    %c0_i32_0 = arith.constant 0 : i32
    return %arg0, %c0_i32 : i32, i32
  }
  func.func @transform_1(%arg0: i32) -> (i32, i32) {
    %c0_i32 = arith.constant 0 : i32
    %c0_i32_0 = arith.constant 0 : i32
    %c0_i32_1 = arith.constant 0 : i32
    return %c0_i32, %c0_i32_0 : i32, i32
  }
  func.func @transform_2(%arg0: i32) -> (i32, i32) {
    %c0_i32 = arith.constant 0 : i32
    %c0_i32_0 = arith.constant 0 : i32
    %c0_i32_1 = arith.constant 0 : i32
    return %c0_i32, %c0_i32_0 : i32, i32
  }
  func.func @transform_3(%arg0: i32) -> (i32, i32) {
    %c0_i32 = arith.constant 0 : i32
    %c0_i32_0 = arith.constant 0 : i32
    %c0_i32_1 = arith.constant 0 : i32
    return %c0_i32, %c0_i32_0 : i32, i32
  }
  func.func @transform_4(%arg0: i32) -> (i32, i32) {
    %c0_i32 = arith.constant 0 : i32
    %c0_i32_0 = arith.constant 0 : i32
    %c0_i32_1 = arith.constant 0 : i32
    return %c0_i32, %c0_i32_0 : i32, i32
  }
  func.func @transform_5(%arg0: i32) -> (i32, i32) {
    %c0_i32 = arith.constant 0 : i32
    %c0_i32_0 = arith.constant 0 : i32
    %c0_i32_1 = arith.constant 0 : i32
    return %c0_i32, %c0_i32_0 : i32, i32
  }
  func.func @transform_6(%arg0: i32) -> (i32, i32) {
    %c0_i32 = arith.constant 0 : i32
    %c0_i32_0 = arith.constant 0 : i32
    %c0_i32_1 = arith.constant 0 : i32
    return %c0_i32, %c0_i32_0 : i32, i32
  }
  func.func @transform_7(%arg0: i32) -> (i32, i32) {
    %c0_i32 = arith.constant 0 : i32
    %c0_i32_0 = arith.constant 0 : i32
    return %c0_i32, %arg0 : i32, i32
  }
}

</mosaic_0001>

<llo_original>
// kernel: tpu_custom_call.1
$region0: #{tpu_custom_call.1}
  #allocation0 [shape = 'u32[]', space=smem, size = 0x4, offset = 0x4, fixed_abs, tag = 'smem constant byte address 0x4 - core index']
  #allocation1 [shape = 'u32[144,128]{1,0:T(1,128)}', space=vmem, size = 0x12000, scoped, tag = 'internal scratch']
  #allocation2 [shape = 'f32[1,1]{1,0:T(1,128)S(1)}', space=vmem, size = 0x200, scoped, tag = 'scoped memory for tpu_custom_call.1']
  %s0 = inlined_call_operand.vmem [shape: f32[8,32], index: 0, kind: input, shape index: {}]
  %s1 = inlined_call_operand.vmem [shape: f32[32,16], index: 1, kind: input, shape index: {}]
  %s2 = inlined_call_operand.vmem [shape: f32[1,16], index: 2, kind: input, shape index: {}]
  %s3 = inlined_call_operand.vmem [shape: f32[16,10], index: 3, kind: input, shape index: {}]
  %s4 = inlined_call_operand.vmem [shape: f32[1,10], index: 4, kind: input, shape index: {}]
  %s5 = inlined_call_operand.vmem [shape: f32[1,10], index: 5, kind: input, shape index: {}]
  %s6 = inlined_call_operand.<no memory space> [shape: f32[1,1], index: 6, kind: input, shape index: {}]
  %s7 = inlined_call_operand.hbm [shape: f32[1,8], index: 7, kind: output, shape index: {}]
  %s8 = sld [smem:[#allocation0]]
  $region38: #{tpu_custom_call.1} parent=0
    _
  %s10 = ssub.s32 1, %s8
  %s11 = scalar_select 0, %s10, %s8
  %v12 = vstv %s6
  %13 = vst [vmem:[#allocation2] sm:$0x1] %v12
  $region1: #{tpu_custom_call.1} parent=0
    #allocation3 [shape = 'u8[512]{0}', space=vmem, size = 0x400, scoped, tag = 'output window, operand 0, single buffered']
    #allocation4 [shape = 's32[1]{0}', space=sflag, size = 0x4, scoped, tag = 'scoped memory for tpu_custom_call.1']
    %14 = vsyncpa [#allocation4], 0
    // Predicated region
    $region2: #{tpu_custom_call.1} parent=1 // pred_check
      _
    $region3: #{tpu_custom_call.1} parent=1 // pred_check_branch
      %16 = sbr.rel (0) target = $region5
    $region4: #{tpu_custom_call.1} parent=1 // pred_region
      _
    $region5: #{tpu_custom_call.1} parent=1 // pred_fallthru
      _
    // Predicated region
    $region6: #{tpu_custom_call.1} parent=1 // pred_check
      _
    $region7: #{tpu_custom_call.1} parent=1 // pred_check_branch
      %18 = sbr.rel (0) target = $region9
    $region8: #{tpu_custom_call.1} parent=1 // pred_region
      _
    $region9: #{tpu_custom_call.1} parent=1 // pred_fallthru
      _
    // Predicated region
    $region10: #{tpu_custom_call.1} parent=1 // pred_check
      _
    $region11: #{tpu_custom_call.1} parent=1 // pred_check_branch
      %20 = sbr.rel (0) target = $region13
    $region12: #{tpu_custom_call.1} parent=1 // pred_region
      _
    $region13: #{tpu_custom_call.1} parent=1 // pred_fallthru
      _
    // Predicated region
    $region14: #{tpu_custom_call.1} parent=1 // pred_check
      _
    $region15: #{tpu_custom_call.1} parent=1 // pred_check_branch
      %22 = sbr.rel (0) target = $region17
    $region16: #{tpu_custom_call.1} parent=1 // pred_region
      _
    $region17: #{tpu_custom_call.1} parent=1 // pred_fallthru
      _
    // Predicated region
    $region18: #{tpu_custom_call.1} parent=1 // pred_check
      _
    $region19: #{tpu_custom_call.1} parent=1 // pred_check_branch
      %24 = sbr.rel (0) target = $region21
    $region20: #{tpu_custom_call.1} parent=1 // pred_region
      _
    $region21: #{tpu_custom_call.1} parent=1 // pred_fallthru
      _
    // Predicated region
    $region22: #{tpu_custom_call.1} parent=1 // pred_check
      _
    $region23: #{tpu_custom_call.1} parent=1 // pred_check_branch
      %26 = sbr.rel (0) target = $region25
    $region24: #{tpu_custom_call.1} parent=1 // pred_region
      _
    $region25: #{tpu_custom_call.1} parent=1 // pred_fallthru
      _
    // Predicated region
    $region26: #{tpu_custom_call.1} parent=1 // pred_check
      _
    $region27: #{tpu_custom_call.1} parent=1 // pred_check_branch
      %28 = sbr.rel (0) target = $region29
    $region28: #{tpu_custom_call.1} parent=1 // pred_region
      _
    $region29: #{tpu_custom_call.1} parent=1 // pred_fallthru
      _
    %v29 = vld [vmem:[%s0] sm:$0xff]
    %v30 = vld [vmem:[%s1] sm:$0xff]
    %v31 = vld [vmem:[%s1 + $0x8] sm:$0xff]
    %v32 = vld [vmem:[%s1 + $0x10] sm:$0xff]
    %v33 = vld [vmem:[%s1 + $0x18] sm:$0xff]
    %v34 = vld [vmem:[%s2] sm:$0x1]
    %v36 = vlaneseq
    %v37 = vshrl.u32 %v36, 7
    %v38 = vsub.s32 0, %v37
    %v39 = vrot.slane %v34, %v38
    %vm41 = vcmask 261120
    %v43 = vsel %vm41, %v29, 0
    %45 = vmatprep.subr.mxu0 0.0
    %46 = vmatpush1.msra.mxu0 %v30
    %47 = vmatprep.subr.mxu0 0.0
    %48 = vmatpush1.msra.mxu0 %v31
    %49 = vmatprep.subr.mxu0 0.0
    %50 = vmatpush1.msra.mxu0 %v32
    %51 = vmatprep.subr.mxu0 0.0
    %52 = vmatpush1.msra.mxu0 %v33
    %53 = vmatprep.subr.mxu0 0.0
    %54 = vmatpush1.msra.mxu0 0.0
    %55 = vmatprep.subr.mxu0 0.0
    %56 = vmatpush1.msra.mxu0 0.0
    %57 = vmatprep.subr.mxu0 0.0
    %58 = vmatpush1.msra.mxu0 0.0
    %59 = vmatprep.subr.mxu0 0.0
    %60 = vmatpush1.msra.mxu0 0.0
    %61 = vmatprep.subr.mxu0 0.0
    %62 = vmatpush1.msra.mxu0 0.0
    %63 = vmatprep.subr.mxu0 0.0
    %64 = vmatpush1.msra.mxu0 0.0
    %65 = vmatprep.subr.mxu0 0.0
    %66 = vmatpush1.msra.mxu0 0.0
    %67 = vmatprep.subr.mxu0 0.0
    %68 = vmatpush1.msra.mxu0 0.0
    %69 = vmatprep.subr.mxu0 0.0
    %70 = vmatpush1.msra.mxu0 0.0
    %71 = vmatprep.subr.mxu0 0.0
    %72 = vmatpush1.msra.mxu0 0.0
    %73 = vmatprep.subr.mxu0 0.0
    %74 = vmatpush1.msra.mxu0 0.0
    %75 = vmatprep.subr.mxu0 0.0
    %76 = vmatpush1.msra.mxu0 0.0
    %77 = vmatprep.subr.mxu0 0.0
    %78 = vmatpush1.msra.mxu0 0.0
    %79 = vmatprep.subr.mxu0 0.0
    %80 = vmatpush1.msra.mxu0 0.0
    %81 = vmatprep.subr.mxu0 0.0
    %82 = vmatpush1.msra.mxu0 0.0
    %83 = vmatprep.subr.mxu0 0.0
    %84 = vmatpush1.msra.mxu0 0.0
    %85 = vmatprep.subr.mxu0 0.0
    %86 = vmatpush1.msra.mxu0 0.0
    %87 = vmatprep.subr.mxu0 0.0
    %88 = vmatpush1.msra.mxu0 0.0
    %89 = vmatprep.subr.mxu0 0.0
    %90 = vmatpush1.msra.mxu0 0.0
    %91 = vmatprep.subr.mxu0 0.0
    %92 = vmatpush1.msra.mxu0 0.0
    %93 = vmatprep.subr.mxu0 0.0
    %94 = vmatpush1.msra.mxu0 0.0
    %95 = vmatprep.subr.mxu0 0.0
    %96 = vmatpush1.msra.mxu0 0.0
    %97 = vmatprep.subr.mxu0 0.0
    %98 = vmatpush1.msra.mxu0 0.0
    %99 = vmatprep.subr.mxu0 0.0
    %100 = vmatpush1.msra.mxu0 0.0
    %101 = vmatprep.subr.mxu0 0.0
    %102 = vmatpush1.msra.mxu0 0.0
    %103 = vmatprep.subr.mxu0 0.0
    %104 = vmatpush1.msra.mxu0 0.0
    %105 = vmatprep.subr.mxu0 0.0
    %106 = vmatpush1.msra.mxu0 0.0
    %107 = vmatprep.subr.mxu0 0.0
    %108 = vmatpush1.msra.mxu0 0.0
    %109 = vmatprep.mubr.f32.mxu0 0.0
    %110 = vmatmul.mubr.f32.gmra.mrb[0].mxu0 %v43
    %v111 = vpop.f32.mrb[0].mxu0
    %v112 = vadd.f32 %v39, %v111
    %v113 = vpop.f32.mrb[0].mxu0
    %114 = vdwg.mxu0
    %v115 = vmax.f32 %v112, 0.0
    %v116 = vld [vmem:[%s3] sm:$0xff]
    %v117 = vld [vmem:[%s3 + $0x8] sm:$0xff]
    %v118 = vld [vmem:[%s4] sm:$0x1]
    %v120 = vlaneseq
    %v121 = vshrl.u32 %v120, 7
    %v122 = vsub.s32 0, %v121
    %v123 = vrot.slane %v118, %v122
    %vm125 = vcmask 130048
    %v127 = vsel %vm125, %v115, 0
    %129 = vmatprep.subr.mxu0 0.0
    %130 = vmatpush1.msra.mxu0 %v116
    %131 = vmatprep.subr.mxu0 0.0
    %132 = vmatpush1.msra.mxu0 %v117
    %133 = vmatprep.subr.mxu0 0.0
    %134 = vmatpush1.msra.mxu0 0.0
    %135 = vmatprep.subr.mxu0 0.0
    %136 = vmatpush1.msra.mxu0 0.0
    %137 = vmatprep.subr.mxu0 0.0
    %138 = vmatpush1.msra.mxu0 0.0
    %139 = vmatprep.subr.mxu0 0.0
    %140 = vmatpush1.msra.mxu0 0.0
    %141 = vmatprep.subr.mxu0 0.0
    %142 = vmatpush1.msra.mxu0 0.0
    %143 = vmatprep.subr.mxu0 0.0
    %144 = vmatpush1.msra.mxu0 0.0
    %145 = vmatprep.subr.mxu0 0.0
    %146 = vmatpush1.msra.mxu0 0.0
    %147 = vmatprep.subr.mxu0 0.0
    %148 = vmatpush1.msra.mxu0 0.0
    %149 = vmatprep.subr.mxu0 0.0
    %150 = vmatpush1.msra.mxu0 0.0
    %151 = vmatprep.subr.mxu0 0.0
    %152 = vmatpush1.msra.mxu0 0.0
    %153 = vmatprep.subr.mxu0 0.0
    %154 = vmatpush1.msra.mxu0 0.0
    %155 = vmatprep.subr.mxu0 0.0
    %156 = vmatpush1.msra.mxu0 0.0
    %157 = vmatprep.subr.mxu0 0.0
    %158 = vmatpush1.msra.mxu0 0.0
    %159 = vmatprep.subr.mxu0 0.0
    %160 = vmatpush1.msra.mxu0 0.0
    %161 = vmatprep.subr.mxu0 0.0
    %162 = vmatpush1.msra.mxu0 0.0
    %163 = vmatprep.subr.mxu0 0.0
    %164 = vmatpush1.msra.mxu0 0.0
    %165 = vmatprep.subr.mxu0 0.0
    %166 = vmatpush1.msra.mxu0 0.0
    %167 = vmatprep.subr.mxu0 0.0
    %168 = vmatpush1.msra.mxu0 0.0
    %169 = vmatprep.subr.mxu0 0.0
    %170 = vmatpush1.msra.mxu0 0.0
    %171 = vmatprep.subr.mxu0 0.0
    %172 = vmatpush1.msra.mxu0 0.0
    %173 = vmatprep.subr.mxu0 0.0
    %174 = vmatpush1.msra.mxu0 0.0
    %175 = vmatprep.subr.mxu0 0.0
    %176 = vmatpush1.msra.mxu0 0.0
    %177 = vmatprep.subr.mxu0 0.0
    %178 = vmatpush1.msra.mxu0 0.0
    %179 = vmatprep.subr.mxu0 0.0
    %180 = vmatpush1.msra.mxu0 0.0
    %181 = vmatprep.subr.mxu0 0.0
    %182 = vmatpush1.msra.mxu0 0.0
    %183 = vmatprep.subr.mxu0 0.0
    %184 = vmatpush1.msra.mxu0 0.0
    %185 = vmatprep.subr.mxu0 0.0
    %186 = vmatpush1.msra.mxu0 0.0
    %187 = vmatprep.subr.mxu0 0.0
    %188 = vmatpush1.msra.mxu0 0.0
    %189 = vmatprep.subr.mxu0 0.0
    %190 = vmatpush1.msra.mxu0 0.0
    %191 = vmatprep.subr.mxu0 0.0
    %192 = vmatpush1.msra.mxu0 0.0
    %193 = vmatprep.mubr.f32.mxu0 0.0
    %194 = vmatmul.mubr.f32.gmra.mrb[0].mxu0 %v127
    %v195 = vpop.f32.mrb[0].mxu0
    %v196 = vadd.f32 %v123, %v195
    %v197 = vpop.f32.mrb[0].mxu0
    %198 = vdwg.mxu0
    %v199 = vmax.f32 %v196, 0.0
    %v200 = vld [vmem:[%s5] sm:$0x1]
    %v201 = vld [vmem:[#allocation2] sm:$0x1]
    %203 = vset.pattern.permute.xlu0 0
    %204 = vperm.xlu0 %203, %v201
    %v205 = vpop.permute.xlu0 %204
    %v207 = vlaneseq
    %v208 = vshrl.u32 %v207, 7
    %v209 = vsub.s32 0, %v208
    %v210 = vrot.slane %v205, %v209
    %vm211 = vcmask 80896
    %v213 = vsel %vm211, %v200, 0
    %v216 = vsel %vm211, %v199, 0
    %218 = vmatprep.subr.mxu0 0.0
    %219 = vmatpush1.xpose.msra.mxu0 %v216
    %220 = vmatprep.subr.mxu0 0.0
    %221 = vmatpush1.xpose.msra.mxu0 0.0
    %222 = vmatprep.subr.mxu0 0.0
    %223 = vmatpush1.xpose.msra.mxu0 0.0
    %224 = vmatprep.subr.mxu0 0.0
    %225 = vmatpush1.xpose.msra.mxu0 0.0
    %226 = vmatprep.subr.mxu0 0.0
    %227 = vmatpush1.xpose.msra.mxu0 0.0
    %228 = vmatprep.subr.mxu0 0.0
    %229 = vmatpush1.xpose.msra.mxu0 0.0
    %230 = vmatprep.subr.mxu0 0.0
    %231 = vmatpush1.xpose.msra.mxu0 0.0
    %232 = vmatprep.subr.mxu0 0.0
    %233 = vmatpush1.xpose.msra.mxu0 0.0
    %234 = vmatprep.subr.mxu0 0.0
    %235 = vmatpush1.xpose.msra.mxu0 0.0
    %236 = vmatprep.subr.mxu0 0.0
    %237 = vmatpush1.xpose.msra.mxu0 0.0
    %238 = vmatprep.subr.mxu0 0.0
    %239 = vmatpush1.xpose.msra.mxu0 0.0
    %240 = vmatprep.subr.mxu0 0.0
    %241 = vmatpush1.xpose.msra.mxu0 0.0
    %242 = vmatprep.subr.mxu0 0.0
    %243 = vmatpush1.xpose.msra.mxu0 0.0
    %244 = vmatprep.subr.mxu0 0.0
    %245 = vmatpush1.xpose.msra.mxu0 0.0
    %246 = vmatprep.subr.mxu0 0.0
    %247 = vmatpush1.xpose.msra.mxu0 0.0
    %248 = vmatprep.subr.mxu0 0.0
    %249 = vmatpush1.xpose.msra.mxu0 0.0
    %250 = vmatprep.subr.mxu0 0.0
    %251 = vmatpush1.xpose.msra.mxu0 0.0
    %252 = vmatprep.subr.mxu0 0.0
    %253 = vmatpush1.xpose.msra.mxu0 0.0
    %254 = vmatprep.subr.mxu0 0.0
    %255 = vmatpush1.xpose.msra.mxu0 0.0
    %256 = vmatprep.subr.mxu0 0.0
    %257 = vmatpush1.xpose.msra.mxu0 0.0
    %258 = vmatprep.subr.mxu0 0.0
    %259 = vmatpush1.xpose.msra.mxu0 0.0
    %260 = vmatprep.subr.mxu0 0.0
    %261 = vmatpush1.xpose.msra.mxu0 0.0
    %262 = vmatprep.subr.mxu0 0.0
    %263 = vmatpush1.xpose.msra.mxu0 0.0
    %264 = vmatprep.subr.mxu0 0.0
    %265 = vmatpush1.xpose.msra.mxu0 0.0
    %266 = vmatprep.subr.mxu0 0.0
    %267 = vmatpush1.xpose.msra.mxu0 0.0
    %268 = vmatprep.subr.mxu0 0.0
    %269 = vmatpush1.xpose.msra.mxu0 0.0
    %270 = vmatprep.subr.mxu0 0.0
    %271 = vmatpush1.xpose.msra.mxu0 0.0
    %272 = vmatprep.subr.mxu0 0.0
    %273 = vmatpush1.xpose.msra.mxu0 0.0
    %274 = vmatprep.subr.mxu0 0.0
    %275 = vmatpush1.xpose.msra.mxu0 0.0
    %276 = vmatprep.subr.mxu0 0.0
    %277 = vmatpush1.xpose.msra.mxu0 0.0
    %278 = vmatprep.subr.mxu0 0.0
    %279 = vmatpush1.xpose.msra.mxu0 0.0
    %280 = vmatprep.subr.mxu0 0.0
    %281 = vmatpush1.xpose.msra.mxu0 0.0
    %282 = vmatprep.mubr.f32.mxu0 0.0
    %283 = vmatmul.mubr.f32.gmra.mrb[0].mxu0 %v213
    %v284 = vpop.f32.mrb[0].mxu0
    %v285 = vadd.f32 %v210, %v284
    %v286 = vpop.f32.mrb[0].mxu0
    %287 = vdwg.mxu0
    %vm288 = vcmask 57344
    %289 = vst.msk [vmem:[#allocation3] sm:$0x1] %vm288, %v285
    // Predicated region
    $region30: #{tpu_custom_call.1} parent=1 // pred_check
      _
    $region31: #{tpu_custom_call.1} parent=1 // pred_check_branch
      %291 = sbr.rel (0) target = $region33
    $region32: #{tpu_custom_call.1} parent=1 // pred_region
      %s293 = ssub.s32 16, 16
      %294 = vsyncadd [#allocation4], %s293
      %s296 = sshll.u32 [#allocation3], 4
      %s297 = int_to_ptr.vmem [resolvable:$true] %s296
      %299 = dma.vmem_to_hbm [thread:$0]  %s297, 16, %s7, [#allocation4]
    $region33: #{tpu_custom_call.1} parent=1 // pred_fallthru
      _
    // Predicated region
    $region34: #{tpu_custom_call.1} parent=1 // pred_check
      _
    $region35: #{tpu_custom_call.1} parent=1 // pred_check_branch
      %301 = sbr.rel (0) target = $region37
    $region36: #{tpu_custom_call.1} parent=1 // pred_region
      %302 = dma.done [#allocation4], 16
    $region37: #{tpu_custom_call.1} parent=1 // pred_fallthru
      _
    %303 = vsyncpa [#allocation4], 1

</llo_original>
